<compile_context>
chip_gen: v6e
topology: v6e:2x2x1
jax: 0.10.0
libtpu: 0.0.40
codegen_flags: <defaults>
</compile_context>

<pallas_src>
import numpy as np
import jax
import jax.numpy as jnp
from jax.experimental import pallas as pl
from jax.experimental.pallas import tpu as pltpu


# Soft per-block byte budget for the (bc_tile, F*T) input block.  With
# double-buffered in + out blocks this stays inside every generation's default
# scoped VMEM (v5e 16 MiB, v6e/v7x 32 MiB) while being large enough (~2 MiB)
# to run near the HBM roofline.
_BLOCK_BYTE_BUDGET = 2 * 1024 * 1024


def _mask_kernel(x_ref, m_ref, o_ref):
    # Pure streaming multiply: one vmul per vreg.  The mask block has a
    # constant index_map so it is DMA'd once and stays resident in VMEM;
    # the kernel is vld/vst/HBM-bound on all chip generations.
    o_ref[...] = x_ref[...] * m_ref[...]


def _choose_bc_tile(bc, row_bytes):
    """Pick how many (F*T)-wide rows to process per grid step."""
    rows_budget = max(1, _BLOCK_BYTE_BUDGET // max(1, row_bytes))
    if bc <= rows_budget:
        bc_tile = bc
        # If there is enough work, split into >= 2 blocks (multiple of 8
        # sublanes) so the 'parallel' grid axis can shard across TensorCores
        # (v7x megacore).
        if bc >= 16:
            half = ((bc // 2 + 7) // 8) * 8
            if 0 < half < bc:
                bc_tile = half
        return bc_tile
    # Multiple blocks: tile rows in multiples of 8 (sublane granularity);
    # partial last block is handled by Pallas (pl.cdiv grid).
    return max(8, (rows_budget // 8) * 8)


def _apply_mask_pallas(x_bcft, mask_ft):
    """x_bcft: (B, C, F, T); mask_ft: (F, T) {0,1} array, same dtype as x."""
    B, C, F, T = x_bcft.shape
    BC, FT = B * C, F * T

    # Lane-dense layout: last axis is F*T (equals the full array dim), so the
    # (8,128) BlockSpec constraint is satisfied and stores are full width.
    x_flat = x_bcft.reshape(BC, FT)
    m_flat = mask_ft.astype(x_bcft.dtype).reshape(1, FT)

    bc_tile = _choose_bc_tile(BC, FT * x_flat.dtype.itemsize)
    grid = (pl.cdiv(BC, bc_tile),)

    out = pl.pallas_call(
        _mask_kernel,
        out_shape=jax.ShapeDtypeStruct((BC, FT), x_flat.dtype),
        grid=grid,
        in_specs=[
            pl.BlockSpec((bc_tile, FT), lambda i: (i, 0)),   # spectrogram rows
            pl.BlockSpec((1, FT), lambda i: (0, 0)),         # mask, VMEM-resident
        ],
        out_specs=pl.BlockSpec((bc_tile, FT), lambda i: (i, 0)),
        # Output aliases the spectrogram input: in-place when the caller
        # donates it; XLA inserts a protective copy otherwise (always correct).
        input_output_aliases={0: 0},
        compiler_params=pltpu.CompilerParams(
            dimension_semantics=("parallel",),
            vmem_limit_bytes=32 * 1024 * 1024,
        ),
    )(x_flat, m_flat)

    return out.reshape(B, C, F, T)


class SpectrogramTransform:
    """JAX/Pallas port of the torch SpectrogramTransform module."""

    def __init__(self, freq_mask_param=10, time_mask_param=10, seed=0):
        self.freq_mask_param = freq_mask_param
        self.time_mask_param = time_mask_param
        # Deterministic host-side RNG replacing np.random / torch.rand draws.
        self._rng = np.random.RandomState(seed)

    def _draw_mask(self, axis_size, mask_param):
        # Mirrors torchaudio.functional.mask_along_axis:
        #   value = rand() * mask_param ; min_value = rand() * (size - value)
        #   spec[..., int(min_value):int(min_value + value)] = 0
        value = self._rng.rand() * mask_param
        min_value = self._rng.rand() * (axis_size - value)
        start = int(min_value)
        end = int(min_value + value)
        return start, max(0, end - start)

    def __call__(self, spectrogram):
        # spectrogram: (B, C, F, T) jnp array (f32 or bf16 both supported;
        # masking with a {0,1} multiplier is exact in either dtype).
        B, C, F, T = spectrogram.shape
        t_type = self._rng.choice(
            ['_frequency_masking', '_time_masking', '_both', '_none'])

        f_start, f_len, t_start, t_len = 0, 0, 0, 0
        if t_type == '_frequency_masking':
            f_start, f_len = self._draw_mask(F, self.freq_mask_param)
        elif t_type == '_time_masking':
            t_start, t_len = self._draw_mask(T, self.time_mask_param)
        elif t_type == '_both':
            f_start, f_len = self._draw_mask(F, self.freq_mask_param // 2)
            t_start, t_len = self._draw_mask(T, self.time_mask_param // 2)

        # '_none' (25% of calls) or degenerate zero-width draws: identity.
        # Skip the kernel and the full HBM round trip entirely.
        if f_len == 0 and t_len == 0:
            return spectrogram

        # Build the combined (F, T) {0,1} mask once on the host; it is tiny
        # (F*T elements) and DMA'd to VMEM once, not per grid step.
        mask = np.ones((F, T), dtype=np.float32)
        if f_len > 0:
            mask[f_start:f_start + f_len, :] = 0.0
        if t_len > 0:
            mask[:, t_start:t_start + t_len] = 0.0
        mask_ft = jnp.asarray(mask, dtype=spectrogram.dtype)

        return _apply_mask_pallas(spectrogram, mask_ft)


if __name__ == "__main__":
    key = jax.random.PRNGKey(0)
    B, C, F, T = 2, 4, 16, 16
    x = jax.random.normal(key, (B, C, F, T), dtype=jnp.float32)

    # 1) Directly exercise the Pallas kernel with a known mask so the kernel
    #    path is guaranteed to run (the module's random draw may pick '_none').
    f0, fw, t0, tw = 3, 5, 2, 6
    ref_mask = np.ones((F, T), dtype=np.float32)
    ref_mask[f0:f0 + fw, :] = 0.0
    ref_mask[:, t0:t0 + tw] = 0.0
    mask_j = jnp.asarray(ref_mask, dtype=x.dtype)
    expected = jax.block_until_ready(x * mask_j)          # XLA reference
    y = jax.block_until_ready(_apply_mask_pallas(x, mask_j))
    assert y.shape == x.shape and y.dtype == x.dtype
    np.testing.assert_allclose(np.asarray(y), np.asarray(expected))

    # 2) Run the full module once (random transform type, host-side draw).
    transform = SpectrogramTransform(freq_mask_param=10, time_mask_param=10, seed=0)
    z = jax.block_until_ready(transform(x))
    assert z.shape == x.shape and z.dtype == x.dtype

    print("KERNEL_OK")
</pallas_src>

<mosaic_0001>
module attributes {stable_mosaic.version = 11 : i64} {
  func.func @_mask_kernel(%arg0: i32, %arg1: memref<8x256xf32, #tpu.memory_space<vmem>>, %arg2: memref<1x256xf32, #tpu.memory_space<vmem>>, %arg3: memref<8x256xf32, #tpu.memory_space<vmem>>) attributes {dimension_semantics = [#tpu.dimension_semantics<parallel>], iteration_bounds = array<i64: 1>, scalar_prefetch = 0 : i64, scratch_operands = 0 : i64, tpu.core_type = #tpu.core_type<tc>, window_params = [{transform_indices = @transform_0, window_bounds = array<i64: 8, 256>}, {pipeline_mode = #tpu.pipeline_mode<synchronous>, transform_indices = @transform_1, window_bounds = array<i64: 1, 256>}, {transform_indices = @transform_2, window_bounds = array<i64: 8, 256>}]} {
    %c0 = arith.constant 0 : index
    %c0_0 = arith.constant 0 : index
    %0 = vector.load %arg1[%c0, %c0_0] : memref<8x256xf32, #tpu.memory_space<vmem>>, vector<8x256xf32>
    %c0_1 = arith.constant 0 : index
    %c0_2 = arith.constant 0 : index
    %1 = vector.load %arg2[%c0_1, %c0_2] : memref<1x256xf32, #tpu.memory_space<vmem>>, vector<1x256xf32>
    %2 = vector.broadcast %1 : vector<1x256xf32> to vector<8x256xf32>
    %3 = arith.mulf %0, %2 : vector<8x256xf32>
    %c0_3 = arith.constant 0 : index
    %c0_4 = arith.constant 0 : index
    %4 = vector.load %arg3[%c0_3, %c0_4] : memref<8x256xf32, #tpu.memory_space<vmem>>, vector<8x256xf32>
    tpu.vector_store %arg3[%c0_3, %c0_4], %3 {strides = array<i32>} : memref<8x256xf32, #tpu.memory_space<vmem>>, vector<8x256xf32>,
    return
  }
  func.func @transform_0(%arg0: i32) -> (i32, i32) {
    %c0_i32 = arith.constant 0 : i32
    %c0_i32_0 = arith.constant 0 : i32
    return %arg0, %c0_i32 : i32, i32
  }
  func.func @transform_1(%arg0: i32) -> (i32, i32) {
    %c0_i32 = arith.constant 0 : i32
    %c0_i32_0 = arith.constant 0 : i32
    %c0_i32_1 = arith.constant 0 : i32
    return %c0_i32, %c0_i32_0 : i32, i32
  }
  func.func @transform_2(%arg0: i32) -> (i32, i32) {
    %c0_i32 = arith.constant 0 : i32
    %c0_i32_0 = arith.constant 0 : i32
    return %arg0, %c0_i32 : i32, i32
  }
}

</mosaic_0001>

<llo_original>
// kernel: tpu_custom_call.1
$region0: #{tpu_custom_call.1}
  #allocation0 [shape = 'u32[]', space=smem, size = 0x4, offset = 0x4, fixed_abs, tag = 'smem constant byte address 0x4 - core index']
  #allocation1 [shape = 'u32[144,128]{1,0:T(1,128)}', space=vmem, size = 0x12000, scoped, tag = 'internal scratch']
  %s0 = inlined_call_operand.hbm [shape: f32[8,256], index: 0, kind: input, shape index: {}, may-alias: {0,2}]
  %s1 = inlined_call_operand.vmem [shape: f32[1,256], index: 1, kind: input, shape index: {}]
  %s2 = inlined_call_operand.hbm [shape: f32[8,256], index: 2, kind: output, shape index: {}, may-alias: {0,2}]
  %s3 = sld [smem:[#allocation0]]
  $region22: #{tpu_custom_call.1} parent=0
    _
  %s5 = ssub.s32 1, %s3
  %s6 = scalar_select 0, %s5, %s3
  $region1: #{tpu_custom_call.1} parent=0
    #allocation2 [shape = 'u8[8192]{0}', space=vmem, size = 0x2000, scoped, tag = 'input window, operand 0, single buffered']
    #allocation3 [shape = 's32[1]{0}', space=sflag, size = 0x4, scoped, tag = 'scoped memory for tpu_custom_call.1']
    #allocation4 [shape = 's32[1]{0}', space=sflag, size = 0x4, scoped, tag = 'scoped memory for tpu_custom_call.1']
    #allocation5 [shape = 'u8[8192]{0}', space=vmem, size = 0x2000, scoped, tag = 'output window, operand 0, single buffered']
    %7 = vsyncpa [#allocation3], 0
    %8 = vsyncpa [#allocation4], 0
    // Predicated region
    $region2: #{tpu_custom_call.1} parent=1 // pred_check
      _
    $region3: #{tpu_custom_call.1} parent=1 // pred_check_branch
      %10 = sbr.rel (0) target = $region5
    $region4: #{tpu_custom_call.1} parent=1 // pred_region
      %s12 = ssub.s32 256, 256
      %13 = vsyncadd [#allocation3], %s12
      %s15 = sshll.u32 [#allocation2], 4
      %s16 = int_to_ptr.vmem [resolvable:$true] %s15
      %18 = dma.hbm_to_vmem [thread:$0]  %s0, 256, %s16, [#allocation3]
    $region5: #{tpu_custom_call.1} parent=1 // pred_fallthru
      _
    // Predicated region
    $region6: #{tpu_custom_call.1} parent=1 // pred_check
      _
    $region7: #{tpu_custom_call.1} parent=1 // pred_check_branch
      %20 = sbr.rel (0) target = $region9
    $region8: #{tpu_custom_call.1} parent=1 // pred_region
      _
    $region9: #{tpu_custom_call.1} parent=1 // pred_fallthru
      _
    // Predicated region
    $region10: #{tpu_custom_call.1} parent=1 // pred_check
      _
    $region11: #{tpu_custom_call.1} parent=1 // pred_check_branch
      %22 = sbr.rel (0) target = $region13
    $region12: #{tpu_custom_call.1} parent=1 // pred_region
      %23 = dma.done [#allocation3], 256
    $region13: #{tpu_custom_call.1} parent=1 // pred_fallthru
      _
    %v24 = vld [vmem:[#allocation2] sm:$0xff]
    %v25 = vld [vmem:[#allocation2 + $0x8] sm:$0xff]
    %v26 = vld [vmem:[%s1] sm:$0x3]
    %v28 = vlaneseq
    %v29 = vshrl.u32 %v28, 7
    %v30 = vsub.s32 0, %v29
    %v31 = vrot.slane %v26, %v30
    %v32 = vlaneseq
    %v33 = vshrl.u32 %v32, 7
    %v34 = vsub.s32 1, %v33
    %v35 = vrot.slane %v26, %v34
    %v38 = vmul.f32 %v24, %v31
    %v39 = vmul.f32 %v25, %v35
    %40 = vst [vmem:[#allocation5] sm:$0xff] %v38
    %41 = vst [vmem:[#allocation5 + $0x8] sm:$0xff] %v39
    // Predicated region
    $region14: #{tpu_custom_call.1} parent=1 // pred_check
      _
    $region15: #{tpu_custom_call.1} parent=1 // pred_check_branch
      %43 = sbr.rel (0) target = $region17
    $region16: #{tpu_custom_call.1} parent=1 // pred_region
      %s45 = ssub.s32 256, 256
      %46 = vsyncadd [#allocation4], %s45
      %s48 = sshll.u32 [#allocation5], 4
      %s49 = int_to_ptr.vmem [resolvable:$true] %s48
      %51 = dma.vmem_to_hbm [thread:$0]  %s49, 256, %s2, [#allocation4]
    $region17: #{tpu_custom_call.1} parent=1 // pred_fallthru
      _
    // Predicated region
    $region18: #{tpu_custom_call.1} parent=1 // pred_check
      _
    $region19: #{tpu_custom_call.1} parent=1 // pred_check_branch
      %53 = sbr.rel (0) target = $region21
    $region20: #{tpu_custom_call.1} parent=1 // pred_region
      %54 = dma.done [#allocation4], 256
    $region21: #{tpu_custom_call.1} parent=1 // pred_fallthru
      _
    %55 = vsyncpa [#allocation3], 1
    %56 = vsyncpa [#allocation4], 1

</llo_original>
